<compile_context>
chip_gen: v6e
topology: v6e:2x2x1
jax: 0.10.0
libtpu: 0.0.40
codegen_flags: <defaults>
</compile_context>

<pallas_src>
import functools

import jax
import jax.numpy as jnp
from jax import lax
from jax.experimental import pallas as pl
from jax.experimental.pallas import tpu as pltpu


def _round_up(a, b):
    return ((a + b - 1) // b) * b


def _cdiv(a, b):
    return (a + b - 1) // b


def _vmem_limit_bytes():
    """Generation-aware scoped-VMEM limit (~half of per-core physical VMEM)."""
    try:
        cap = int(pltpu.get_tpu_info().vmem_capacity_bytes)
    except Exception:
        cap = 64 * 1024 * 1024          # conservative fallback (v7x per-core size)
    return max(8 * 1024 * 1024, min(cap // 2, 64 * 1024 * 1024))


def _choose_tile(p_out, per_lane_bytes, budget_bytes):
    """Lane-tile size TM (multiple of 128) and tile count per image."""
    max_tm = (budget_bytes // max(per_lane_bytes, 1)) // 128 * 128
    max_tm = max(256, min(2048, max_tm))
    if p_out <= max_tm:                 # one tile per image for small images
        return _round_up(p_out, 128), 1
    tiles = _cdiv(p_out, max_tm)        # balanced tiles, each a 128-multiple
    return _round_up(_cdiv(p_out, tiles), 128), tiles


# ---------------------------------------------------------------------------
# Pallas kernel: one (Cout, TM) output tile of one image.
#   xw_ref: (Cin, TM + HALO)   overlapping input window (bf16, flat padded px)
#   w_ref : (Cout, KH*KW*Cin)  tap-folded weights (bf16, VMEM-resident)
#   b_ref : (Cout, 1)          bias column (f32, VMEM-resident)
#   o_ref : (Cout, TM)         output tile (lane-dense last dim)
# ---------------------------------------------------------------------------
def _conv_fold_kernel(xw_ref, w_ref, b_ref, o_ref, *, taps_off, tm):
    xw = xw_ref[...]                                        # (Cin, TM+HALO)
    # Fold the KH*KW taps into the contraction dim: K-stacked shifted slices.
    a = jnp.concatenate([xw[:, off:off + tm] for off in taps_off], axis=0)
    acc = jnp.dot(w_ref[...], a, preferred_element_type=jnp.float32)  # (Cout, TM)
    o_ref[...] = (acc + b_ref[...]).astype(o_ref.dtype)


# ---------------------------------------------------------------------------
# Conv2d forward (NCHW, matching torch.nn.functional.conv2d).
# ---------------------------------------------------------------------------
@functools.partial(jax.jit, static_argnames=("padding", "stride", "compute_dtype"))
def conv2d_forward(x, conv_kernel, bias, *, padding=1, stride=1,
                   compute_dtype=jnp.bfloat16):
    N, C, H, W = x.shape
    Cout, Cin, KH, KW = conv_kernel.shape
    assert Cin == C, f"inp channels = {C}, but in channels was {Cin}"

    if stride != 1:
        # TODO(synk): no strided Pallas path (would need a column-gathering
        # index_map); computing stride-1 and subsampling wastes (1 - 1/s^2) of
        # the work, so use XLA's native conv for stride > 1 (module default 1).
        out = lax.conv_general_dilated(
            x, conv_kernel, window_strides=(stride, stride),
            padding=((padding, padding), (padding, padding)),
            dimension_numbers=("NCHW", "OIHW", "NCHW"))
        return out + bias.reshape(1, Cout, 1, 1).astype(out.dtype)

    Hp, Wp = H + 2 * padding, W + 2 * padding
    assert Hp >= KH and Wp >= KW
    Ho, Wo = Hp - KH + 1, Wp - KW + 1            # stride-1 output extent

    # Flat-index trick (stride-1 over the full padded width): output pixel j of
    # tap (kh, kw) reads flat padded pixel j + kh*Wp + kw.  Columns >= Wo are
    # garbage and cropped afterwards; only the first Ho rows are computed.
    taps_off = tuple(kh * Wp + kw for kh in range(KH) for kw in range(KW))
    halo = taps_off[-1]
    halo_pad = _round_up(max(halo, 1), 128)
    K = KH * KW * Cin
    P = Ho * Wp                                  # flat output pixels tiled

    # Tile sizing under a generation-aware VMEM budget.
    # TODO(synk): for extremely wide padded rows ((KH-1)*Wp >> tile budget) the
    # per-tile halo gets large; a row-tiled layout would be needed there.
    in_b = jnp.dtype(compute_dtype).itemsize
    out_b = jnp.dtype(x.dtype).itemsize
    per_lane = 2 * Cin * in_b + 2 * Cout * out_b + 2 * K * in_b + Cout * 4
    vmem_limit = _vmem_limit_bytes()
    tm, tiles = _choose_tile(P, per_lane, vmem_limit // 2)
    tw = tm + halo_pad                           # overlapping window width
    flat_len = (tiles - 1) * tm + tw             # padded flat pixels per image

    # Single merged pad: spatial zero-pad + enough extra zero rows at the
    # bottom so the flattened image covers every tile window; cast to bf16 so
    # the dominant DMA stream is half-width.
    extra_rows = _cdiv(max(flat_len - Hp * Wp, 0), Wp)
    xp = jnp.pad(x.astype(compute_dtype),
                 ((0, 0), (0, 0), (padding, padding + extra_rows),
                  (padding, padding)))
    xf = xp.reshape(N, C, -1)
    # Per-tile overlapping windows (no duplication when tiles == 1).
    xw = jnp.stack([xf[:, :, i * tm:i * tm + tw] for i in range(tiles)], axis=1)

    # Weights folded tap-major into the contraction dim: (Cout, KH*KW*Cin).
    w_folded = jnp.transpose(conv_kernel, (0, 2, 3, 1)).reshape(Cout, K)
    w_folded = w_folded.astype(compute_dtype)
    bias_col = bias.reshape(Cout, 1).astype(jnp.float32)

    kern = functools.partial(_conv_fold_kernel, taps_off=taps_off, tm=tm)

    out_flat = pl.pallas_call(
        kern,
        out_shape=jax.ShapeDtypeStruct((N, Cout, tiles * tm), x.dtype),
        grid_spec=pltpu.PrefetchScalarGridSpec(
            num_scalar_prefetch=0,
            grid=(N, tiles),
            in_specs=[
                # one overlapping input window per (image, tile) grid step
                pl.BlockSpec((None, None, C, tw), lambda n, i: (n, i, 0, 0)),
                # folded weights & bias: constant index_map -> VMEM-resident
                pl.BlockSpec((Cout, K), lambda n, i: (0, 0)),
                pl.BlockSpec((Cout, 1), lambda n, i: (0, 0)),
            ],
            out_specs=pl.BlockSpec((None, Cout, tm), lambda n, i: (n, 0, i)),
        ),
        compiler_params=pltpu.CompilerParams(
            dimension_semantics=("parallel", "parallel"),
            vmem_limit_bytes=vmem_limit),
    )(xw, w_folded, bias_col)

    # Crop: first Ho rows, first Wo columns of each padded-width row.
    out = out_flat[:, :, :P].reshape(N, Cout, Ho, Wp)[:, :, :, :Wo]
    return out


# ---------------------------------------------------------------------------
# Deterministic parameter init (Kaiming-like kernel, normal bias), matching
# util.kaiming_kernel / util.normal_kernel of the original module.
# ---------------------------------------------------------------------------
def init_params(key, in_channels, out_channels, kernel_size, dtype=jnp.float32):
    k_key, b_key = jax.random.split(key)
    fan_in = in_channels * kernel_size * kernel_size
    std = (2.0 / fan_in) ** 0.5
    conv_kernel = std * jax.random.normal(
        k_key, (out_channels, in_channels, kernel_size, kernel_size), dtype=dtype)
    bias = jax.random.normal(b_key, (out_channels,), dtype=dtype)
    return conv_kernel, bias


if __name__ == "__main__":
    key = jax.random.PRNGKey(0)
    x_key, p_key = jax.random.split(key)

    # Small shapes consistent with the module: batch=2, C_in=4, 16x16 spatial,
    # C_out=8, kernel_size=3, padding=1, stride=1.
    N, Cin, H, W = 2, 4, 16, 16
    Cout, Ksz = 8, 3

    x = jax.random.normal(x_key, (N, Cin, H, W), dtype=jnp.float32)
    conv_kernel, bias = init_params(p_key, Cin, Cout, Ksz)

    out = conv2d_forward(x, conv_kernel, bias, padding=1, stride=1)
    out = jax.block_until_ready(out)

    # Reference: high-precision conv over the same bf16-rounded operands the
    # kernel's MXU consumes (accumulation is f32 in both).
    xq = x.astype(jnp.bfloat16).astype(jnp.float32)
    wq = conv_kernel.astype(jnp.bfloat16).astype(jnp.float32)
    ref = lax.conv_general_dilated(
        xq, wq, window_strides=(1, 1), padding=((1, 1), (1, 1)),
        dimension_numbers=("NCHW", "OIHW", "NCHW"),
        precision=lax.Precision.HIGHEST) + bias.reshape(1, Cout, 1, 1)

    assert out.shape == (N, Cout, H, W), out.shape
    assert jnp.allclose(out, ref, atol=1e-2, rtol=1e-2), "mismatch vs reference conv"

    print("KERNEL_OK")
</pallas_src>

<mosaic_0001>
module attributes {stable_mosaic.version = 11 : i64} {
  func.func @_conv_fold_kernel(%arg0: i32, %arg1: i32, %arg2: memref<1x1x4x512xbf16, #tpu.memory_space<vmem>>, %arg3: memref<8x36xbf16, #tpu.memory_space<vmem>>, %arg4: memref<8x1xf32, #tpu.memory_space<vmem>>, %arg5: memref<1x8x384xf32, #tpu.memory_space<vmem>>) attributes {dimension_semantics = [#tpu.dimension_semantics<parallel>, #tpu.dimension_semantics<parallel>], iteration_bounds = array<i64: 2, 1>, scalar_prefetch = 0 : i64, scratch_operands = 0 : i64, tpu.core_type = #tpu.core_type<tc>, window_params = [{transform_indices = @transform_0, window_bounds = array<i64: 1, 1, 4, 512>}, {pipeline_mode = #tpu.pipeline_mode<synchronous>, transform_indices = @transform_1, window_bounds = array<i64: 8, 36>}, {pipeline_mode = #tpu.pipeline_mode<synchronous>, transform_indices = @transform_2, window_bounds = array<i64: 8, 1>}, {transform_indices = @transform_3, window_bounds = array<i64: 1, 8, 384>}]} {
    %c0 = arith.constant 0 : index
    %c0_0 = arith.constant 0 : index
    %c0_1 = arith.constant 0 : index
    %c0_2 = arith.constant 0 : index
    %0 = vector.load %arg2[%c0, %c0_0, %c0_1, %c0_2] : memref<1x1x4x512xbf16, #tpu.memory_space<vmem>>, vector<1x1x4x512xbf16>
    %1 = vector.shape_cast %0 : vector<1x1x4x512xbf16> to vector<4x512xbf16>
    %2 = vector.extract_strided_slice %1 {offsets = [0, 0], sizes = [4, 384], strides = [1, 1]} : vector<4x512xbf16> to vector<4x384xbf16>
    %3 = vector.extract_strided_slice %1 {offsets = [0, 1], sizes = [4, 384], strides = [1, 1]} : vector<4x512xbf16> to vector<4x384xbf16>
    %4 = vector.extract_strided_slice %1 {offsets = [0, 2], sizes = [4, 384], strides = [1, 1]} : vector<4x512xbf16> to vector<4x384xbf16>
    %5 = vector.extract_strided_slice %1 {offsets = [0, 18], sizes = [4, 384], strides = [1, 1]} : vector<4x512xbf16> to vector<4x384xbf16>
    %6 = vector.extract_strided_slice %1 {offsets = [0, 19], sizes = [4, 384], strides = [1, 1]} : vector<4x512xbf16> to vector<4x384xbf16>
    %7 = vector.extract_strided_slice %1 {offsets = [0, 20], sizes = [4, 384], strides = [1, 1]} : vector<4x512xbf16> to vector<4x384xbf16>
    %8 = vector.extract_strided_slice %1 {offsets = [0, 36], sizes = [4, 384], strides = [1, 1]} : vector<4x512xbf16> to vector<4x384xbf16>
    %9 = vector.extract_strided_slice %1 {offsets = [0, 37], sizes = [4, 384], strides = [1, 1]} : vector<4x512xbf16> to vector<4x384xbf16>
    %10 = vector.extract_strided_slice %1 {offsets = [0, 38], sizes = [4, 384], strides = [1, 1]} : vector<4x512xbf16> to vector<4x384xbf16>
    %11 = tpu.concatenate %2, %3, %4, %5, %6, %7, %8, %9, %10 in 0 : vector<4x384xbf16>, vector<4x384xbf16>, vector<4x384xbf16>, vector<4x384xbf16>, vector<4x384xbf16>, vector<4x384xbf16>, vector<4x384xbf16>, vector<4x384xbf16>, vector<4x384xbf16> -> vector<36x384xbf16>
    %c0_3 = arith.constant 0 : index
    %c0_4 = arith.constant 0 : index
    %12 = vector.load %arg3[%c0_3, %c0_4] : memref<8x36xbf16, #tpu.memory_space<vmem>>, vector<8x36xbf16>
    %cst = arith.constant dense<0.000000e+00> : vector<8x384xf32>
    %13 = tpu.matmul %12, %11, %cst {dimension_numbers = #tpu.dot_dimension_numbers<[1], [0], [0], [1], [0, 0, 1, 1], [], []>} : vector<8x36xbf16>, vector<36x384xbf16>, vector<8x384xf32> -> vector<8x384xf32>
    %c0_5 = arith.constant 0 : index
    %c0_6 = arith.constant 0 : index
    %14 = vector.load %arg4[%c0_5, %c0_6] : memref<8x1xf32, #tpu.memory_space<vmem>>, vector<8x1xf32>
    %15 = vector.broadcast %14 : vector<8x1xf32> to vector<8x384xf32>
    %16 = arith.addf %13, %15 : vector<8x384xf32>
    %c0_7 = arith.constant 0 : index
    %c0_8 = arith.constant 0 : index
    %c0_9 = arith.constant 0 : index
    %17 = vector.load %arg5[%c0_7, %c0_8, %c0_9] : memref<1x8x384xf32, #tpu.memory_space<vmem>>, vector<1x8x384xf32>
    %18 = vector.shape_cast %17 : vector<1x8x384xf32> to vector<8x384xf32>
    %19 = vector.shape_cast %16 : vector<8x384xf32> to vector<1x8x384xf32>
    tpu.vector_store %arg5[%c0_7, %c0_8, %c0_9], %19 {strides = array<i32>} : memref<1x8x384xf32, #tpu.memory_space<vmem>>, vector<1x8x384xf32>,
    return
  }
  func.func @transform_0(%arg0: i32, %arg1: i32) -> (i32, i32, i32, i32) {
    %c0_i32 = arith.constant 0 : i32
    %c0_i32_0 = arith.constant 0 : i32
    %c0_i32_1 = arith.constant 0 : i32
    return %arg0, %arg1, %c0_i32, %c0_i32_0 : i32, i32, i32, i32
  }
  func.func @transform_1(%arg0: i32, %arg1: i32) -> (i32, i32) {
    %c0_i32 = arith.constant 0 : i32
    %c0_i32_0 = arith.constant 0 : i32
    %c0_i32_1 = arith.constant 0 : i32
    return %c0_i32, %c0_i32_0 : i32, i32
  }
  func.func @transform_2(%arg0: i32, %arg1: i32) -> (i32, i32) {
    %c0_i32 = arith.constant 0 : i32
    %c0_i32_0 = arith.constant 0 : i32
    %c0_i32_1 = arith.constant 0 : i32
    return %c0_i32, %c0_i32_0 : i32, i32
  }
  func.func @transform_3(%arg0: i32, %arg1: i32) -> (i32, i32, i32) {
    %c0_i32 = arith.constant 0 : i32
    %c0_i32_0 = arith.constant 0 : i32
    return %arg0, %c0_i32, %arg1 : i32, i32, i32
  }
}

</mosaic_0001>

<llo_original>
// kernel: conv2d_forward.1
$region0: #{conv2d_forward.1}
  #allocation0 [shape = 'u32[]', space=smem, size = 0x4, offset = 0x4, fixed_abs, tag = 'smem constant byte address 0x4 - core index']
  #allocation1 [shape = 'u32[144,128]{1,0:T(1,128)}', space=vmem, size = 0x12000, scoped, tag = 'internal scratch']
  %s0 = inlined_call_operand.vmem [shape: bf16[2,1,4,512], index: 0, kind: input, shape index: {}]
  %s1 = inlined_call_operand.vmem [shape: bf16[8,36], index: 1, kind: input, shape index: {}]
  %s2 = inlined_call_operand.vmem [shape: f32[8,1], index: 2, kind: input, shape index: {}]
  %s3 = inlined_call_operand.vmem [shape: f32[2,8,384], index: 3, kind: output, shape index: {}]
  %s4 = sld [smem:[#allocation0]]
  $region45: #{conv2d_forward.1} parent=0
    _
  %s6 = ssub.s32 1, %s4
  %s7 = scalar_select 0, %s6, %s4
  loop: start=0, step=1, limit=4
  $region2: #{conv2d_forward.1} parent=0 // loop_pre_header
    _
  $region3: #{conv2d_forward.1} parent=0 // loop_header
    %s9 = sphi 0, %s13
    %p10 = scmp.ge.s32.totalorder %s9, 4
    %s16 = sphi 0, %s28
    %s17 = sphi 0, %s24
    %s18 = sphi 0, %s16
    %s19 = sphi 0, %s17
    %s20 = sphi 0, %s18
    %s21 = sphi 0, %s19
    %s33 = sphi 0, %s35
    %s36 = sphi 0, %s33
    %s37 = sphi 0, %s36
    %s53 = sphi 0, %s37
    %s57 = sphi 0, %s57
    %s59 = sphi 0, %s57
    %s60 = sphi 0, %s59
    %s74 = sphi 0, %s60
    %s78 = sphi 0, %s78
    %s80 = sphi 0, %s78
    %s81 = sphi 0, %s80
    %s95 = sphi 0, %s81
    %s103 = sphi 0, %s105
    %s106 = sphi 0, %s103
    %s107 = sphi 0, %s106
    %s123 = sphi 0, %s107
  $region4: #{conv2d_forward.1} parent=0 // loop_header_branch
    %12 = sbr.rel (%p10) target = $region8
  $region5: #{conv2d_forward.1} parent=0 // loop_body
    %s14 = ssub.s32 %s9, 1
    %s15 = ssub.s32 %s9, 2
    %s22 = sadd.s32 1, %s17
    %p23 = scmp.ge.s32.totalorder %s22, 1
    %s24 = scalar_select %p23, 0, %s22
    %s25 = sadd.s32 1, %s16
    %s26 = scalar_select %p23, %s25, %s16
    %p27 = scmp.ge.s32.totalorder %s26, 2
    %s28 = scalar_select %p27, 0, %s26
    %s29 = ssub.s32 %s16, %s28
    %s30 = ssub.s32 %s17, %s24
    %s31 = sor.u32 %s29, %s30
    %p32 = scmp.eq.s32.totalorder %s31, 0
    %s34 = sadd.s32 %s33, 1
    %s35 = scalar_select %p32, %s33, %s34
    %p38 = pneg %p32
    %p39 = scmp.eq.s32.totalorder %s9, 1
    %p40 = por %p38, %p39
    %p41 = scmp.ne.s32.totalorder %s33, %s36
    %p42 = scmp.eq.s32.totalorder %s9, 0
    %p43 = por %p41, %p42
    %p44 = scmp.ne.s32.totalorder %s33, %s36
    %p45 = scmp.eq.s32.totalorder %s14, 1
    %p46 = por %p44, %p45
    %p47 = scmp.ne.s32.totalorder %s36, %s37
    %p48 = scmp.eq.s32.totalorder %s14, 0
    %p49 = por %p47, %p48
    %p50 = scmp.ne.s32.totalorder %s36, %s37
    %p51 = scmp.eq.s32.totalorder %s15, 1
    %p52 = por %p50, %p51
    %p54 = scmp.ne.s32.totalorder %s37, %s53
    %p55 = scmp.eq.s32.totalorder %s15, 0
    %p56 = por %p54, %p55
    %s58 = sadd.s32 %s57, 1
    %p61 = scmp.eq.s32.totalorder %s9, 1
    %p62 = scmp.ne.s32.totalorder %s57, %s59
    %p63 = scmp.eq.s32.totalorder %s9, 0
    %p64 = por %p62, %p63
    %p65 = scmp.ne.s32.totalorder %s57, %s59
    %p66 = scmp.eq.s32.totalorder %s14, 1
    %p67 = por %p65, %p66
    %p68 = scmp.ne.s32.totalorder %s59, %s60
    %p69 = scmp.eq.s32.totalorder %s14, 0
    %p70 = por %p68, %p69
    %p71 = scmp.ne.s32.totalorder %s59, %s60
    %p72 = scmp.eq.s32.totalorder %s15, 1
    %p73 = por %p71, %p72
    %p75 = scmp.ne.s32.totalorder %s60, %s74
    %p76 = scmp.eq.s32.totalorder %s15, 0
    %p77 = por %p75, %p76
    %s79 = sadd.s32 %s78, 1
    %p82 = scmp.eq.s32.totalorder %s9, 1
    %p83 = scmp.ne.s32.totalorder %s78, %s80
    %p84 = scmp.eq.s32.totalorder %s9, 0
    %p85 = por %p83, %p84
    %p86 = scmp.ne.s32.totalorder %s78, %s80
    %p87 = scmp.eq.s32.totalorder %s14, 1
    %p88 = por %p86, %p87
    %p89 = scmp.ne.s32.totalorder %s80, %s81
    %p90 = scmp.eq.s32.totalorder %s14, 0
    %p91 = por %p89, %p90
    %p92 = scmp.ne.s32.totalorder %s80, %s81
    %p93 = scmp.eq.s32.totalorder %s15, 1
    %p94 = por %p92, %p93
    %p96 = scmp.ne.s32.totalorder %s81, %s95
    %p97 = scmp.eq.s32.totalorder %s15, 0
    %p98 = por %p96, %p97
    %s99 = ssub.s32 %s16, %s28
    %s100 = ssub.s32 %s17, %s24
    %s101 = sor.u32 %s99, %s100
    %p102 = scmp.eq.s32.totalorder %s101, 0
    %s104 = sadd.s32 %s103, 1
    %s105 = scalar_select %p102, %s103, %s104
    %p108 = pneg %p102
    %p109 = scmp.eq.s32.totalorder %s9, 1
    %p110 = por %p108, %p109
    %p111 = scmp.ne.s32.totalorder %s103, %s106
    %p112 = scmp.eq.s32.totalorder %s9, 0
    %p113 = por %p111, %p112
    %p114 = scmp.ne.s32.totalorder %s103, %s106
    %p115 = scmp.eq.s32.totalorder %s14, 1
    %p116 = por %p114, %p115
    %p117 = scmp.ne.s32.totalorder %s106, %s107
    %p118 = scmp.eq.s32.totalorder %s14, 0
    %p119 = por %p117, %p118
    %p120 = scmp.ne.s32.totalorder %s106, %s107
    %p121 = scmp.eq.s32.totalorder %s15, 1
    %p122 = por %p120, %p121
    %p124 = scmp.ne.s32.totalorder %s107, %s123
    %p125 = scmp.eq.s32.totalorder %s15, 0
    %p126 = por %p124, %p125
    %p127 = scmp.le.s32.totalorder 1, %s9
    %p128 = scmp.lt.s32.totalorder %s9, 3
    %p129 = pnand %p127, %p128
    %p130 = pneg %p129
    // Predicated region
    $region9: #{conv2d_forward.1} parent=5 // pred_check
      _
    $region10: #{conv2d_forward.1} parent=5 // pred_check_branch
      %132 = sbr.rel (%p129) target = $region12
    $region11: #{conv2d_forward.1} parent=5 // pred_region
      %s133 = ssub.s32 %s9, 1
      // Predicated region
      $region13: #{conv2d_forward.1} parent=11 // pred_check
        %p134 = pneg %p70
      $region14: #{conv2d_forward.1} parent=11 // pred_check_branch
        %136 = sbr.rel (%p134) target = $region16
      $region15: #{conv2d_forward.1} parent=11 // pred_region
        _
      $region16: #{conv2d_forward.1} parent=11 // pred_fallthru
        _
      // Predicated region
      $region17: #{conv2d_forward.1} parent=11 // pred_check
        %p137 = pneg %p91
      $region18: #{conv2d_forward.1} parent=11 // pred_check_branch
        %139 = sbr.rel (%p137) target = $region20
      $region19: #{conv2d_forward.1} parent=11 // pred_region
        _
      $region20: #{conv2d_forward.1} parent=11 // pred_fallthru
        _
    $region12: #{conv2d_forward.1} parent=5 // pred_fallthru
      _
    %p140 = scmp.lt.s32.totalorder %s9, 2
    // Predicated region
    $region21: #{conv2d_forward.1} parent=5 // pred_check
      %p141 = pneg %p140
    $region22: #{conv2d_forward.1} parent=5 // pred_check_branch
      %143 = sbr.rel (%p141) target = $region24
    $region23: #{conv2d_forward.1} parent=5 // pred_region
      // Predicated region
      $region25: #{conv2d_forward.1} parent=23 // pred_check
        %p144 = pneg %p43
      $region26: #{conv2d_forward.1} parent=23 // pred_check_branch
        %146 = sbr.rel (%p144) target = $region28
      $region27: #{conv2d_forward.1} parent=23 // pred_region
        %p147 = scmp.lt.s32.totalorder %s16, 1
        %s148 = scalar_select %p147, %s16, 1
        %p149 = scmp.lt.s32.totalorder %s17, 0
        %s150 = scalar_select %p149, %s17, 0
        %s151 = smul.addr %s150, 4
        %s152 = smul.addr %s148, 4
        %s153 = sadd.s32 %s151, %s152
        %s154 = smul.addr %s153, 2
        %s155 = scalar_lea.vmem %s0, %s154
      $region28: #{conv2d_forward.1} parent=23 // pred_fallthru
        _
    $region24: #{conv2d_forward.1} parent=5 // pred_fallthru
      _
    %p156 = scmp.le.s32.totalorder 1, %s9
    %p157 = scmp.lt.s32.totalorder %s9, 3
    %p158 = pnand %p156, %p157
    %p159 = pneg %p158
    // Predicated region
    $region29: #{conv2d_forward.1} parent=5 // pred_check
      _
    $region30: #{conv2d_forward.1} parent=5 // pred_check_branch
      %161 = sbr.rel (%p158) target = $region32
    $region31: #{conv2d_forward.1} parent=5 // pred_region
      %s162 = ssub.s32 %s9, 1
      %p163 = scmp.lt.s32.totalorder %s18, 1
      %s164 = scalar_select %p163, %s18, 1
      %p165 = scmp.lt.s32.totalorder %s19, 0
      %s166 = scalar_select %p165, %s19, 0
      %s167 = smul.addr %s166, 4
      %s168 = smul.addr %s164, 4
      %s169 = sadd.s32 %s167, %s168
      %s170 = smul.addr %s169, 2
      %s171 = scalar_lea.vmem %s0, %s170
      %p172 = pneg %p49
      %p173 = pneg %p46
      %p174 = pneg %p70
      %p175 = pneg %p67
      %p176 = pneg %p91
      %p177 = pneg %p88
      %p178 = pneg %p119
      %p179 = pneg %p116
      %s180 = smul.u32 3, %s19
      %p181 = scmp.lt.s32.totalorder %s18, 1
      %s182 = scalar_select %p181, %s18, 1
      %p183 = scmp.lt.s32.totalorder %s180, 2
      %s184 = scalar_select %p183, %s180, 2
      %s185 = smul.addr %s182, 3
      %s186 = sadd.s32 %s184, %s185
      %s187 = smul.addr %s186, 8
      %s188 = scalar_lea.vmem %s3, %s187
      %p189 = scmp.lt.s32.totalorder %s18, 1
      %s190 = scalar_select %p189, %s18, 1
      %p191 = scmp.lt.s32.totalorder %s19, 0
      %s192 = scalar_select %p191, %s19, 0
      %s193 = smul.addr %s192, 4
      %s194 = smul.addr %s190, 4
      %s195 = sadd.s32 %s193, %s194
      %s196 = smul.addr %s195, 2
      %s197 = scalar_lea.vmem %s0, %s196
      %s198 = smul.u32 3, %s19
      %p199 = scmp.lt.s32.totalorder %s18, 1
      %s200 = scalar_select %p199, %s18, 1
      %p201 = scmp.lt.s32.totalorder %s198, 2
      %s202 = scalar_select %p201, %s198, 2
      %s203 = smul.addr %s200, 3
      %s204 = sadd.s32 %s202, %s203
      %s205 = smul.addr %s204, 8
      %s206 = scalar_lea.vmem %s3, %s205
      %s207 = smul.u32 3, %s19
      %v209 = vld [vmem:[%s197] sm:$0xff]
      %v211 = vcombine.high %v209, %v209
      %v213 = vunpack.c.l.s4 1983009808
      %v214 = vunpack.c.0.s8 %v213
      %v215 = vlaneseq
      %v216 = vshrl.u32 %v215, 7
      %v217 = vsub.s32 %v214, %v216
      %v218 = vrot.slane %v209, %v217
      %v220 = vunpack.c.l.s4 1983009808
      %v221 = vunpack.c.0.s8 %v220
      %v222 = vlaneseq
      %v223 = vshrl.u32 %v222, 7
      %v224 = vsub.s32 %v221, %v223
      %v225 = vrot.slane %v211, %v224
      %v226 = vcombine.high %v218, %v218
      %v227 = vcombine.low %v209, %v209
      %v229 = vunpack.c.l.s4 1983009808
      %v230 = vunpack.c.0.s8 %v229
      %v231 = vlaneseq
      %v232 = vshrl.u32 %v231, 7
      %v233 = vsub.s32 %v230, %v232
      %v234 = vrot.slane %v227, %v233
      %v235 = vcombine.high %v234, %v234
      %236 = vrot.lane.b32.xlu0 %v234, 127
      %v237 = vpop.permute.xlu0 %236
      %238 = vrot.lane.b32.xlu0 %v235, 127
      %v239 = vpop.permute.xlu0 %238
      %240 = vrot.lane.b32.xlu0 %v218, 127
      %v241 = vpop.permute.xlu0 %240
      %242 = vrot.lane.b32.xlu0 %v226, 127
      %v243 = vpop.permute.xlu0 %242
      %vm244 = vcmask 1039360
      %v245 = vsel %vm244, %v237, %v239
      %v246 = vsel %vm244, %v239, %v241
      %v247 = vsel %vm244, %v241, %v243
      %v248 = vcombine.low %v218, %v218
      %v249 = vcombine.low %v225, %v225
      %250 = vrot.lane.b32.xlu0 %v248, 126
      %v251 = vpop.permute.xlu0 %250
      %252 = vrot.lane.b32.xlu0 %v218, 126
      %v253 = vpop.permute.xlu0 %252
      %254 = vrot.lane.b32.xlu0 %v249, 126
      %v255 = vpop.permute.xlu0 %254
      %256 = vrot.lane.b32.xlu0 %v225, 126
      %v257 = vpop.permute.xlu0 %256
      %vm258 = vcmask 1031168
      %v259 = vsel %vm258, %v251, %v253
      %v260 = vsel %vm258, %v253, %v255
      %v261 = vsel %vm258, %v255, %v257
      %v262 = vcombine.low %v234, %v234
      %263 = vrot.lane.b32.xlu0 %v262, 110
      %v264 = vpop.permute.xlu0 %263
      %265 = vrot.lane.b32.xlu0 %v234, 110
      %v266 = vpop.permute.xlu0 %265
      %267 = vrot.lane.b32.xlu0 %v248, 110
      %v268 = vpop.permute.xlu0 %267
      %269 = vrot.lane.b32.xlu0 %v218, 110
      %v270 = vpop.permute.xlu0 %269
      %vm271 = vcmask 900096
      %v272 = vsel %vm271, %v264, %v266
      %v273 = vsel %vm271, %v266, %v268
      %v274 = vsel %vm271, %v268, %v270
      %v275 = vcombine.high %v225, %v225
      %276 = vrot.lane.b32.xlu0 %v218, 109
      %v277 = vpop.permute.xlu0 %276
      %278 = vrot.lane.b32.xlu0 %v226, 109
      %v279 = vpop.permute.xlu0 %278
      %280 = vrot.lane.b32.xlu0 %v225, 109
      %v281 = vpop.permute.xlu0 %280
      %282 = vrot.lane.b32.xlu0 %v275, 109
      %v283 = vpop.permute.xlu0 %282
      %vm284 = vcmask 891904
      %v285 = vsel %vm284, %v277, %v279
      %v286 = vsel %vm284, %v279, %v281
      %v287 = vsel %vm284, %v281, %v283
      %288 = vrot.lane.b32.xlu0 %v234, 108
      %v289 = vpop.permute.xlu0 %288
      %290 = vrot.lane.b32.xlu0 %v235, 108
      %v291 = vpop.permute.xlu0 %290
      %292 = vrot.lane.b32.xlu0 %v218, 108
      %v293 = vpop.permute.xlu0 %292
      %294 = vrot.lane.b32.xlu0 %v226, 108
      %v295 = vpop.permute.xlu0 %294
      %vm296 = vcmask 883712
      %v297 = vsel %vm296, %v289, %v291
      %v298 = vsel %vm296, %v291, %v293
      %v299 = vsel %vm296, %v293, %v295
      %300 = vrot.lane.b32.xlu0 %v248, 92
      %v301 = vpop.permute.xlu0 %300
      %302 = vrot.lane.b32.xlu0 %v218, 92
      %v303 = vpop.permute.xlu0 %302
      %304 = vrot.lane.b32.xlu0 %v249, 92
      %v305 = vpop.permute.xlu0 %304
      %306 = vrot.lane.b32.xlu0 %v225, 92
      %v307 = vpop.permute.xlu0 %306
      %vm308 = vcmask 752640
      %v309 = vsel %vm308, %v301, %v303
      %v310 = vsel %vm308, %v303, %v305
      %v311 = vsel %vm308, %v305, %v307
      %312 = vrot.lane.b32.xlu0 %v262, 91
      %v313 = vpop.permute.xlu0 %312
      %314 = vrot.lane.b32.xlu0 %v234, 91
      %v315 = vpop.permute.xlu0 %314
      %316 = vrot.lane.b32.xlu0 %v248, 91
      %v317 = vpop.permute.xlu0 %316
      %318 = vrot.lane.b32.xlu0 %v218, 91
      %v319 = vpop.permute.xlu0 %318
      %vm320 = vcmask 744448
      %v321 = vsel %vm320, %v313, %v315
      %v322 = vsel %vm320, %v315, %v317
      %v323 = vsel %vm320, %v317, %v319
      %324 = vrot.lane.b32.xlu0 %v218, 90
      %v325 = vpop.permute.xlu0 %324
      %326 = vrot.lane.b32.xlu0 %v226, 90
      %v327 = vpop.permute.xlu0 %326
      %328 = vrot.lane.b32.xlu0 %v225, 90
      %v329 = vpop.permute.xlu0 %328
      %330 = vrot.lane.b32.xlu0 %v275, 90
      %v331 = vpop.permute.xlu0 %330
      %vm332 = vcmask 736256
      %v333 = vsel %vm332, %v325, %v327
      %v334 = vsel %vm332, %v327, %v329
      %v335 = vsel %vm332, %v329, %v331
      %vm336 = vcmask 1041408
      %v339 = vsel %vm336, %v218, %v245
      %v342 = vsel %vm336, %v226, %v246
      %v345 = vsel %vm336, %v225, %v247
      %vm346 = vcmask 1043456
      %v348 = vsel %vm346, %v339, %v259
      %v350 = vsel %vm346, %v342, %v260
      %v352 = vsel %vm346, %v345, %v261
      %vm353 = vcmask 1045504
      %v355 = vsel %vm353, %v348, %v272
      %v358 = vsel %vm353, %v350, %v273
      %v361 = vsel %vm353, %v352, %v274
      %v365 = vsel %vm336, %v285, %v297
      %v368 = vsel %vm336, %v286, %v298
      %v371 = vsel %vm336, %v287, %v299
      %v373 = vsel %vm346, %v365, %v309
      %v375 = vsel %vm346, %v368, %v310
      %v377 = vsel %vm346, %v371, %v311
      %v379 = vsel %vm353, %v373, %v321
      %v382 = vsel %vm353, %v375, %v322
      %v385 = vsel %vm353, %v377, %v323
      %v387 = vld [vmem:[%s1] sm:$0xf]
      %v388 = vld [vmem:[%s2] sm:$0xff]
      %390 = vset.pattern.permute.xlu0 0
      %391 = vperm.xlu0 %390, %v388
      %v392 = vpop.permute.xlu0 %391
      %vm394 = vcmask 293888
      %v396 = vsel %vm394, %v387, 0
      %v399 = vsel %vm336, %v333, 0
      %v402 = vsel %vm336, %v334, 0
      %v405 = vsel %vm336, %v335, 0
      %407 = vmatprep.subr.bf16.mxu0 0
      %408 = vmatpush1.bf16.msra.mxu0 0
      %409 = vmatprep.subr.bf16.mxu0 0
      %410 = vmatpush1.bf16.msra.mxu0 0
      %411 = vmatprep.subr.bf16.mxu0 0
      %412 = vmatpush1.bf16.msra.mxu0 0
      %413 = vmatprep.subr.bf16.mxu0 0
      %414 = vmatpush1.bf16.msra.mxu0 0
      %415 = vmatprep.subr.bf16.mxu0 0
      %416 = vmatpush1.bf16.msra.mxu0 0
      %417 = vmatprep.subr.bf16.mxu0 %v402
      %418 = vmatpush1.bf16.msra.mxu0 %v399
      %419 = vmatprep.subr.bf16.mxu0 %v382
      %420 = vmatpush1.bf16.msra.mxu0 %v379
      %421 = vmatprep.subr.bf16.mxu0 %v358
      %422 = vmatpush1.bf16.msra.mxu0 %v355
      %423 = vmatprep.subr.bf16.mxu0 0
      %424 = vmatpush2.bf16.msra.mxu0 0
      %425 = vmatprep.subr.bf16.mxu0 0
      %426 = vmatpush2.bf16.msra.mxu0 0
      %427 = vmatprep.subr.bf16.mxu0 0
      %428 = vmatpush2.bf16.msra.mxu0 0
      %429 = vmatprep.subr.bf16.mxu0 0
      %430 = vmatpush2.bf16.msra.mxu0 0
      %431 = vmatprep.subr.bf16.mxu0 0
      %432 = vmatpush2.bf16.msra.mxu0 0
      %433 = vmatprep.subr.bf16.mxu0 0
      %434 = vmatpush2.bf16.msra.mxu0 0
      %435 = vmatprep.subr.bf16.mxu0 0
      %436 = vmatpush2.bf16.msra.mxu0 0
      %437 = vmatprep.subr.bf16.mxu0 0
      %438 = vmatpush2.bf16.msra.mxu0 0
      %439 = vmatprep.mubr.bf16.mxu0 0
      %440 = vmatmul.mubr.bf16.gmra.mxu0 %v396
      %v441 = vpop.f32.mrf.mxu0
      %v442 = vadd.f32 %v392, %v441
      %v443 = vpop.f32.mrf.mxu0
      %v444 = vadd.f32 %v392, %v443
      %v445 = vpop.f32.mrf.mxu0
      %v446 = vpop.f32.mrf.mxu0
      %447 = vdwg.mxu0
      %448 = vmatprep.subr.bf16.mxu0 0
      %449 = vmatpush1.bf16.msra.mxu0 0
      %450 = vmatprep.subr.bf16.mxu0 0
      %451 = vmatpush1.bf16.msra.mxu0 0
      %452 = vmatprep.subr.bf16.mxu0 0
      %453 = vmatpush1.bf16.msra.mxu0 0
      %454 = vmatprep.subr.bf16.mxu0 0
      %455 = vmatpush1.bf16.msra.mxu0 0
      %456 = vmatprep.subr.bf16.mxu0 0
      %457 = vmatpush1.bf16.msra.mxu0 0
      %458 = vmatprep.subr.bf16.mxu0 0
      %459 = vmatpush1.bf16.msra.mxu0 %v405
      %460 = vmatprep.subr.bf16.mxu0 0
      %461 = vmatpush1.bf16.msra.mxu0 %v385
      %462 = vmatprep.subr.bf16.mxu0 0
      %463 = vmatpush1.bf16.msra.mxu0 %v361
      %464 = vmatprep.subr.bf16.mxu0 0
      %465 = vmatpush2.bf16.msra.mxu0 0
      %466 = vmatprep.subr.bf16.mxu0 0
      %467 = vmatpush2.bf16.msra.mxu0 0
      %468 = vmatprep.subr.bf16.mxu0 0
      %469 = vmatpush2.bf16.msra.mxu0 0
      %470 = vmatprep.subr.bf16.mxu0 0
      %471 = vmatpush2.bf16.msra.mxu0 0
      %472 = vmatprep.subr.bf16.mxu0 0
      %473 = vmatpush2.bf16.msra.mxu0 0
      %474 = vmatprep.subr.bf16.mxu0 0
      %475 = vmatpush2.bf16.msra.mxu0 0
      %476 = vmatprep.subr.bf16.mxu0 0
      %477 = vmatpush2.bf16.msra.mxu0 0
      %478 = vmatprep.subr.bf16.mxu0 0
      %479 = vmatpush2.bf16.msra.mxu0 0
      %480 = vmatprep.mubr.bf16.mxu0 0
      %481 = vmatmul.mubr.bf16.gmra.mxu0 %v396
      %v482 = vpop.f32.mrf.mxu0
      %v483 = vadd.f32 %v392, %v482
      %v484 = vpop.f32.mrf.mxu0
      %v485 = vpop.f32.mrf.mxu0
      %v486 = vpop.f32.mrf.mxu0
      %487 = vdwg.mxu0
      %488 = vst [vmem:[%s206] sm:$0xff] %v442
      %489 = vst [vmem:[%s206 + $0x8] sm:$0xff] %v444
      %490 = vst [vmem:[%s206 + $0x10] sm:$0xff] %v483
      %s491 = smul.u32 3, %s19
      %p492 = scmp.lt.s32.totalorder %s18, 1
      %s493 = scalar_select %p492, %s18, 1
      %p494 = scmp.lt.s32.totalorder %s491, 2
      %s495 = scalar_select %p494, %s491, 2
      %s496 = smul.addr %s493, 3
      %s497 = sadd.s32 %s495, %s496
      %s498 = smul.addr %s497, 8
      %s499 = scalar_lea.vmem %s3, %s498
      // Predicated region
      $region33: #{conv2d_forward.1} parent=31 // pred_check
        %p500 = pneg %p116
      $region34: #{conv2d_forward.1} parent=31 // pred_check_branch
        %502 = sbr.rel (%p500) target = $region36
      $region35: #{conv2d_forward.1} parent=31 // pred_region
        %s503 = smul.u32 3, %s19
      $region36: #{conv2d_forward.1} parent=31 // pred_fallthru
        _
    $region32: #{conv2d_forward.1} parent=5 // pred_fallthru
      _
    %p504 = scmp.le.s32.totalorder 2, %s9
    // Predicated region
    $region37: #{conv2d_forward.1} parent=5 // pred_check
      %p505 = pneg %p504
    $region38: #{conv2d_forward.1} parent=5 // pred_check_branch
      %507 = sbr.rel (%p505) target = $region40
    $region39: #{conv2d_forward.1} parent=5 // pred_region
      %s508 = ssub.s32 %s9, 2
      // Predicated region
      $region41: #{conv2d_forward.1} parent=39 // pred_check
        %p509 = pneg %p122
      $region42: #{conv2d_forward.1} parent=39 // pred_check_branch
        %511 = sbr.rel (%p509) target = $region44
      $region43: #{conv2d_forward.1} parent=39 // pred_region
        %s512 = smul.u32 3, %s21
        %p513 = scmp.lt.s32.totalorder %s20, 1
        %s514 = scalar_select %p513, %s20, 1
        %p515 = scmp.lt.s32.totalorder %s512, 2
        %s516 = scalar_select %p515, %s512, 2
        %s517 = smul.addr %s514, 3
        %s518 = sadd.s32 %s516, %s517
        %s519 = smul.addr %s518, 8
        %s520 = scalar_lea.vmem %s3, %s519
      $region44: #{conv2d_forward.1} parent=39 // pred_fallthru
        _
    $region40: #{conv2d_forward.1} parent=5 // pred_fallthru
      _
  $region6: #{conv2d_forward.1} parent=0 // loop_footer
    %s13 = sadd.s32 1, %s9
  $region7: #{conv2d_forward.1} parent=0 // loop_footer_branch
    %8 = sbr.rel target = $region3
  $region8: #{conv2d_forward.1} parent=0 // loop_exit
    _

</llo_original>
